<compile_context>
chip_gen: v7x
topology: tpu7x:2x2x1
jax: 0.10.0
libtpu: 0.0.40
codegen_flags: <defaults>
</compile_context>

<pallas_src>
import jax
import jax.numpy as jnp
from jax.experimental import pallas as pl
from jax.experimental.pallas import tpu as pltpu


def _relu_kernel(x_ref, o_ref):
    # Elementwise max with 0 fused into the streaming copy.
    o_ref[...] = jnp.maximum(x_ref[...], 0).astype(o_ref.dtype)


_LANES = 128
_TARGET_BLOCK_BYTES = 8 << 20   # ~8 MiB blocks: <5% step overhead even on v7x
_SINGLE_BLOCK_BYTES = 2 << 20   # below this, one full-array block is cheapest
_MIN_GRID_STEPS = 4             # engage both v7x TCs + pipeline on mid sizes
_VMEM_LIMIT_BYTES = 48 << 20    # 4 x 8 MiB double-buffered blocks + headroom


def _choose_slab(numel):
    """Lane-dense (rows, cols) factorization; None if numel % 128 != 0."""
    for cols in (8 * _LANES, 4 * _LANES, 2 * _LANES, _LANES):
        if numel % cols == 0:
            return numel // cols, cols
    return None


def _choose_tile_rows(rows, cols, itemsize):
    """Pick block rows: ~8 MiB blocks, but >= _MIN_GRID_STEPS steps for big slabs."""
    row_bytes = cols * itemsize
    slab_bytes = rows * row_bytes
    if slab_bytes <= _SINGLE_BLOCK_BYTES:
        # Single full-array block (always layout-legal); grid overhead would
        # dominate any split at this size.
        return rows
    # Multiple of 32 rows keeps sublane tiling legal for f32/bf16/int8.
    tr = max(32, (_TARGET_BLOCK_BYTES // row_bytes) // 32 * 32)
    # Force at least _MIN_GRID_STEPS balanced blocks so the "parallel" grid
    # axis can shard across both v7x TensorCores and DMAs pipeline.
    cap = max(32, (rows // _MIN_GRID_STEPS) // 32 * 32)
    tr = min(tr, cap)
    return min(tr, rows)


@jax.jit
def relu(x):
    """Pallas-backed equivalent of torch.relu(x) (same shape/dtype)."""
    orig_shape = x.shape
    numel = x.size
    if numel == 0:
        return x

    slab_dims = _choose_slab(numel)
    if slab_dims is None:
        # Ragged tail (numel % 128 != 0): a fused XLA elementwise op is already
        # exactly 1 HBM read + 1 write, beating any pad+slice Pallas path.
        # TODO(synk): in-kernel tail masking via scalar-prefetch numel if a
        # standalone Pallas path for ragged sizes ever matters.
        return jnp.maximum(x, 0)

    rows, cols = slab_dims
    slab = x.reshape(rows, cols)

    itemsize = jnp.dtype(x.dtype).itemsize
    tile_rows = _choose_tile_rows(rows, cols, itemsize)
    grid = (pl.cdiv(rows, tile_rows),)

    out = pl.pallas_call(
        _relu_kernel,
        out_shape=jax.ShapeDtypeStruct((rows, cols), x.dtype),
        grid_spec=pltpu.PrefetchScalarGridSpec(
            num_scalar_prefetch=0,
            grid=grid,
            in_specs=[pl.BlockSpec((tile_rows, cols), lambda i: (i, 0))],
            out_specs=pl.BlockSpec((tile_rows, cols), lambda i: (i, 0)),
        ),
        compiler_params=pltpu.CompilerParams(
            dimension_semantics=("parallel",),
            vmem_limit_bytes=_VMEM_LIMIT_BYTES,
        ),
        cost_estimate=pl.CostEstimate(
            flops=numel,
            transcendentals=0,
            bytes_accessed=2 * numel * itemsize,
        ),
    )(slab)

    return out.reshape(orig_shape)


class ReLU:
    """JAX/Pallas mirror of the changeit3d ReLU(nn.Module)."""

    def __call__(self, x):
        return relu(x)


if __name__ == "__main__":
    key = jax.random.PRNGKey(0)
    mod = ReLU()

    # Small NCHW-like input, same scale as the changeit3d usage.
    x = jax.random.normal(key, (2, 4, 16, 16), dtype=jnp.float32)
    y = jax.block_until_ready(mod(x))
    ref = jnp.maximum(x, 0.0)
    assert y.shape == x.shape and y.dtype == x.dtype
    assert jnp.array_equal(y, ref)

    # A 128-multiple but non-power-of-two slab (exercises the slab chooser).
    k2 = jax.random.PRNGKey(1)
    x2 = jax.random.normal(k2, (3, 5, 384), dtype=jnp.float32)
    y2 = jax.block_until_ready(mod(x2))
    assert jnp.array_equal(y2, jnp.maximum(x2, 0.0))

    # Ragged numel (not a multiple of 128) -> fused-XLA fallback path.
    k3 = jax.random.PRNGKey(2)
    x3 = jax.random.normal(k3, (7, 13), dtype=jnp.float32)
    y3 = jax.block_until_ready(mod(x3))
    assert jnp.array_equal(y3, jnp.maximum(x3, 0.0))

    print("KERNEL_OK")
</pallas_src>

<mosaic_0001>
module attributes {stable_mosaic.version = 11 : i64} {
  func.func @_relu_kernel(%arg0: i32, %arg1: memref<2x1024xf32, #tpu.memory_space<vmem>>, %arg2: memref<2x1024xf32, #tpu.memory_space<vmem>>) attributes {dimension_semantics = [#tpu.dimension_semantics<parallel>], iteration_bounds = array<i64: 1>, scalar_prefetch = 0 : i64, scratch_operands = 0 : i64, tpu.core_type = #tpu.core_type<tc>, window_params = [{transform_indices = @transform_0, window_bounds = array<i64: 2, 1024>}, {transform_indices = @transform_1, window_bounds = array<i64: 2, 1024>}]} {
    %c0 = arith.constant 0 : index
    %c0_0 = arith.constant 0 : index
    %0 = vector.load %arg1[%c0, %c0_0] : memref<2x1024xf32, #tpu.memory_space<vmem>>, vector<2x1024xf32>
    %cst = arith.constant 0.000000e+00 : f32
    %1 = vector.broadcast %cst : f32 to vector<2x1024xf32>
    %2 = arith.maximumf %0, %1 : vector<2x1024xf32>
    %c0_1 = arith.constant 0 : index
    %c0_2 = arith.constant 0 : index
    %3 = vector.load %arg2[%c0_1, %c0_2] : memref<2x1024xf32, #tpu.memory_space<vmem>>, vector<2x1024xf32>
    tpu.vector_store %arg2[%c0_1, %c0_2], %2 {strides = array<i32>} : memref<2x1024xf32, #tpu.memory_space<vmem>>, vector<2x1024xf32>,
    return
  }
  func.func @transform_0(%arg0: i32) -> (i32, i32) {
    %c0_i32 = arith.constant 0 : i32
    %c0_i32_0 = arith.constant 0 : i32
    return %arg0, %c0_i32 : i32, i32
  }
  func.func @transform_1(%arg0: i32) -> (i32, i32) {
    %c0_i32 = arith.constant 0 : i32
    %c0_i32_0 = arith.constant 0 : i32
    return %arg0, %c0_i32 : i32, i32
  }
}

</mosaic_0001>

<llo_original>
// kernel: relu.1
$region0: #{relu.1}
  #allocation0 [shape = 'u32[]', space=smem, size = 0x4, offset = 0x4, fixed_abs, tag = 'smem constant byte address 0x4 - core index']
  #allocation1 [shape = 'u32[144,128]{1,0:T(1,128)}', space=vmem, size = 0x12000, scoped, tag = 'internal scratch']
  %s0 = inlined_call_operand.vmem [shape: f32[2,1024], index: 0, kind: input, shape index: {}]
  %s1 = inlined_call_operand.vmem [shape: f32[2,1024], index: 1, kind: output, shape index: {}]
  %s2 = sld [smem:[#allocation0]]
  $region14: #{relu.1} parent=0
    _
  %s4 = ssub.s32 1, %s2
  %s5 = scalar_select 0, %s4, %s2
  // Predicated region
  $region2: #{relu.1} parent=0 // pred_check
    _
  $region3: #{relu.1} parent=0 // pred_check_branch
    %7 = sbr.rel (0) target = $region5
  $region4: #{relu.1} parent=0 // pred_region
    _
  $region5: #{relu.1} parent=0 // pred_fallthru
    _
  %v8 = vld [vmem:[%s0] sm:$0xff]
  %v9 = vld [vmem:[%s0 + $0x8] sm:$0xff]
  %v10 = vmax.f32 %v8, 0.0
  %v11 = vmax.f32 %v9, 0.0
  %12 = vst [vmem:[%s1] sm:$0xff] %v10
  %13 = vst [vmem:[%s1 + $0x8] sm:$0xff] %v11
  // Predicated region
  $region6: #{relu.1} parent=0 // pred_check
    _
  $region7: #{relu.1} parent=0 // pred_check_branch
    %15 = sbr.rel (0) target = $region9
  $region8: #{relu.1} parent=0 // pred_region
    _
  $region9: #{relu.1} parent=0 // pred_fallthru
    _
  // Predicated region
  $region10: #{relu.1} parent=0 // pred_check
    _
  $region11: #{relu.1} parent=0 // pred_check_branch
    %17 = sbr.rel (0) target = $region13
  $region12: #{relu.1} parent=0 // pred_region
    _
  $region13: #{relu.1} parent=0 // pred_fallthru
    _

</llo_original>
